<compile_context>
chip_gen: v7x
topology: tpu7x:2x2x1
jax: 0.10.0
libtpu: 0.0.40
codegen_flags: <defaults>
</compile_context>

<pallas_src>
import jax
import jax.numpy as jnp
from jax import lax
from jax.experimental import pallas as pl
from jax.experimental.pallas import tpu as pltpu


def _round_up(x, m):
    return ((x + m - 1) // m) * m


def _critic_kernel(x_ref, w1_ref, b1_ref, w2_ref, b2_ref, out_ref):
    # fc1 on the MXU: (TB, D) @ (D, H) with f32 accumulation.  Runs in the dtype the
    # inputs were streamed in (f32 or bf16).
    h = jnp.dot(x_ref[...], w1_ref[...], preferred_element_type=jnp.float32)
    # bias + ReLU on the VPU, in f32.
    h = jnp.maximum(h + b1_ref[...], 0.0)
    # Value head (N=1) as an MXU "NT" matmul: (1, H) . (TB, H)^T -> (1, TB).
    # This lands the per-tile q values lane-dense (batch on the lane axis), so the
    # store below is a full-width vst instead of a 1-lane masked store.
    q = lax.dot_general(
        w2_ref[...], h,
        dimension_numbers=(((1,), (1,)), ((), ())),
        preferred_element_type=jnp.float32)
    # b2 is a true scalar read from SMEM.
    out_ref[...] = (q + b2_ref[0, 0]).astype(out_ref.dtype)


def critic_forward(state, w1, b1, w2_row, b2, *, block_batch=512):
    """Fused forward pass of the PPO CriticNetwork.

    state:  (B, input_dims)            f32 or bf16
    w1:     (input_dims, fc1_dims)     f32 or bf16 (transposed vs PyTorch fc1.weight)
    b1:     (1, fc1_dims)              f32
    w2_row: (1, fc1_dims)              f32 (same layout as PyTorch q1.weight)
    b2:     (1, 1)                     f32
    returns (B, 1) f32
    """
    B, D = state.shape
    H = w1.shape[1]

    # Sublane alignment of the batch tile: 8 rows for 32-bit inputs, 16 for bf16, 32 for int8.
    sub = max(8, (32 // (state.dtype.itemsize * 8)) * 8)

    if B >= 256:
        # Multi-tile: TB is a multiple of 128 so the lane-dense (1, TB) output blocks
        # are lane-aligned; cap TB so the grid has >= 2 steps (keeps both v7x
        # TensorCores busy; no cost on single-TC v5e/v6e).
        TB = max(128, (min(block_batch, B) // 128) * 128)
        TB = min(TB, max(128, _round_up(pl.cdiv(B, 2), 128)))
        grid_b = pl.cdiv(B, TB)
    else:
        # Tiny batch: a single tile covering the whole (sublane-rounded) batch.
        TB = max(sub, _round_up(B, sub))
        grid_b = 1
    B_pad = grid_b * TB

    # Streamed x tiles get a deeper pipeline only when there is something to pipeline.
    if grid_b > 1:
        x_spec = pl.BlockSpec((TB, D), lambda i: (i, 0), pipeline_mode=pl.Buffered(3))
    else:
        x_spec = pl.BlockSpec((TB, D), lambda i: (i, 0))

    in_specs = [
        x_spec,
        # Weights / biases: same block every grid step -> stay VMEM-resident.
        pl.BlockSpec((D, H), lambda i: (0, 0)),
        pl.BlockSpec((1, H), lambda i: (0, 0)),
        pl.BlockSpec((1, H), lambda i: (0, 0)),
        # Scalar output bias on the scalar path.
        pl.BlockSpec(memory_space=pltpu.MemorySpace.SMEM),
    ]
    out_spec = pl.BlockSpec((1, TB), lambda i: (0, i))

    # VMEM budget from actual buffer sizes (2x slack), clamped to stay well under
    # v7x's 64 MiB physical VMEM.
    n_x_buf = 3 if grid_b > 1 else 1
    vmem_bytes = (
        n_x_buf * TB * D * state.dtype.itemsize        # streamed x tiles
        + 2 * D * H * w1.dtype.itemsize                # resident fc1 weight buffers
        + 2 * H * (b1.dtype.itemsize + w2_row.dtype.itemsize)
        + 2 * TB * 4                                   # lane-dense output blocks
        + TB * H * 4                                   # f32 intermediate h
    )
    vmem_limit = int(min(32 * 1024 * 1024, max(8 * 1024 * 1024, 2 * vmem_bytes)))

    # Advisory cost so XLA schedules this small custom call sensibly.
    flops = 2 * B * D * H + 2 * B * H
    bytes_accessed = (B * D * state.dtype.itemsize
                      + D * H * w1.dtype.itemsize
                      + H * (b1.dtype.itemsize + w2_row.dtype.itemsize)
                      + b2.dtype.itemsize
                      + B_pad * 4)
    cost = pl.CostEstimate(flops=int(flops), transcendentals=0,
                           bytes_accessed=int(bytes_accessed))

    out_row = pl.pallas_call(
        _critic_kernel,
        out_shape=jax.ShapeDtypeStruct((1, B_pad), jnp.float32),
        grid_spec=pltpu.PrefetchScalarGridSpec(
            num_scalar_prefetch=0,
            grid=(grid_b,),
            in_specs=in_specs,
            out_specs=out_spec,
        ),
        compiler_params=pltpu.CompilerParams(
            dimension_semantics=("parallel",),   # batch tiles are independent
            vmem_limit_bytes=vmem_limit,
        ),
        cost_estimate=cost,
    )(state, w1, b1, w2_row, b2)

    # (1, grid*TB) lane-dense row -> (B, 1) column.  The tail slice copies only
    # B*4 bytes (vs the full extra HBM pass the old jnp.pad cost).
    return out_row.reshape(-1)[:B].reshape(B, 1)


def init_critic_params(key, input_dims, fc1_dims):
    """Deterministic init mirroring PyTorch nn.Linear default:
    U(-1/sqrt(fan_in), 1/sqrt(fan_in)) for both weight and bias."""
    k1, k2, k3, k4 = jax.random.split(key, 4)
    bound1 = 1.0 / jnp.sqrt(jnp.float32(input_dims))
    bound2 = 1.0 / jnp.sqrt(jnp.float32(fc1_dims))
    w1 = jax.random.uniform(k1, (input_dims, fc1_dims), jnp.float32, -bound1, bound1)
    b1 = jax.random.uniform(k2, (1, fc1_dims), jnp.float32, -bound1, bound1)
    w2_row = jax.random.uniform(k3, (1, fc1_dims), jnp.float32, -bound2, bound2)
    b2 = jax.random.uniform(k4, (1, 1), jnp.float32, -bound2, bound2)
    return w1, b1, w2_row, b2


# TODO(synk): Adam optimizer state and checkpoint save/load from the original module are
# training/IO concerns with no Pallas-kernel equivalent; only the forward pass is fused.

if __name__ == "__main__":
    batch, input_dims, fc1_dims = 20, 16, 32

    key = jax.random.PRNGKey(0)
    k_state, k_params, k_big = jax.random.split(key, 3)
    state = jax.random.normal(k_state, (batch, input_dims), jnp.float32)
    w1, b1, w2_row, b2 = init_critic_params(k_params, input_dims, fc1_dims)

    # Pure-JAX reference (same semantics as the PyTorch forward).
    q_ref = jnp.maximum(state @ w1 + b1, 0.0) @ w2_row.T + b2

    # 1) f32 path, single-tile (small batch).
    q = critic_forward(state, w1, b1, w2_row, b2)
    jax.block_until_ready(q)
    assert q.shape == (batch, 1)
    assert jnp.allclose(q, q_ref, atol=1e-5, rtol=1e-5)

    # 2) Multi-tile path: grid > 1, lane-aligned 128-row tiles, partial tail block.
    big_batch = 300
    state_big = jax.random.normal(k_big, (big_batch, input_dims), jnp.float32)
    q_big = critic_forward(state_big, w1, b1, w2_row, b2, block_batch=128)
    jax.block_until_ready(q_big)
    q_big_ref = jnp.maximum(state_big @ w1 + b1, 0.0) @ w2_row.T + b2
    assert q_big.shape == (big_batch, 1)
    assert jnp.allclose(q_big, q_big_ref, atol=1e-5, rtol=1e-5)

    # 3) bf16-streamed inputs (v5e MXU / HBM-bandwidth option); accumulation and the
    #    value head stay in f32, so only input-rounding error remains.
    q_bf = critic_forward(state.astype(jnp.bfloat16), w1.astype(jnp.bfloat16),
                          b1, w2_row, b2)
    jax.block_until_ready(q_bf)
    assert q_bf.shape == (batch, 1)
    assert jnp.allclose(q_bf, q_ref, atol=5e-2, rtol=5e-2)

    print("KERNEL_OK")
</pallas_src>

<mosaic_0001>
module attributes {stable_mosaic.version = 11 : i64} {
  func.func @_critic_kernel(%arg0: i32, %arg1: memref<24x16xf32, #tpu.memory_space<vmem>>, %arg2: memref<16x32xf32, #tpu.memory_space<vmem>>, %arg3: memref<1x32xf32, #tpu.memory_space<vmem>>, %arg4: memref<1x32xf32, #tpu.memory_space<vmem>>, %arg5: memref<1x1xf32, #tpu.memory_space<smem>>, %arg6: memref<1x24xf32, #tpu.memory_space<vmem>>) attributes {dimension_semantics = [#tpu.dimension_semantics<parallel>], iteration_bounds = array<i64: 1>, scalar_prefetch = 0 : i64, scratch_operands = 0 : i64, tpu.core_type = #tpu.core_type<tc>, window_params = [{transform_indices = @transform_0, window_bounds = array<i64: 24, 16>}, {pipeline_mode = #tpu.pipeline_mode<synchronous>, transform_indices = @transform_1, window_bounds = array<i64: 16, 32>}, {pipeline_mode = #tpu.pipeline_mode<synchronous>, transform_indices = @transform_2, window_bounds = array<i64: 1, 32>}, {pipeline_mode = #tpu.pipeline_mode<synchronous>, transform_indices = @transform_3, window_bounds = array<i64: 1, 32>}, {transform_indices = @transform_4, window_bounds = array<i64: 1, 1>}, {transform_indices = @transform_5, window_bounds = array<i64: 1, 24>}]} {
    %c0 = arith.constant 0 : index
    %c0_0 = arith.constant 0 : index
    %0 = vector.load %arg1[%c0, %c0_0] : memref<24x16xf32, #tpu.memory_space<vmem>>, vector<24x16xf32>
    %c0_1 = arith.constant 0 : index
    %c0_2 = arith.constant 0 : index
    %1 = vector.load %arg2[%c0_1, %c0_2] : memref<16x32xf32, #tpu.memory_space<vmem>>, vector<16x32xf32>
    %cst = arith.constant dense<0.000000e+00> : vector<24x32xf32>
    %2 = tpu.matmul %0, %1, %cst {dimension_numbers = #tpu.dot_dimension_numbers<[1], [0], [0], [1], [0, 0, 1, 1], [], []>} : vector<24x16xf32>, vector<16x32xf32>, vector<24x32xf32> -> vector<24x32xf32>
    %c0_3 = arith.constant 0 : index
    %c0_4 = arith.constant 0 : index
    %3 = vector.load %arg3[%c0_3, %c0_4] : memref<1x32xf32, #tpu.memory_space<vmem>>, vector<1x32xf32>
    %4 = vector.broadcast %3 : vector<1x32xf32> to vector<24x32xf32>
    %5 = arith.addf %2, %4 : vector<24x32xf32>
    %cst_5 = arith.constant 0.000000e+00 : f32
    %6 = vector.broadcast %cst_5 : f32 to vector<24x32xf32>
    %7 = arith.maximumf %5, %6 : vector<24x32xf32>
    %c0_6 = arith.constant 0 : index
    %c0_7 = arith.constant 0 : index
    %8 = vector.load %arg4[%c0_6, %c0_7] : memref<1x32xf32, #tpu.memory_space<vmem>>, vector<1x32xf32>
    %cst_8 = arith.constant dense<0.000000e+00> : vector<1x24xf32>
    %9 = tpu.matmul %8, %7, %cst_8 {dimension_numbers = #tpu.dot_dimension_numbers<[1], [1], [0], [0], [0, 0, 1, 0], [], []>} : vector<1x32xf32>, vector<24x32xf32>, vector<1x24xf32> -> vector<1x24xf32>
    %c0_9 = arith.constant 0 : index
    %c0_10 = arith.constant 0 : index
    %10 = memref.load %arg5[%c0_9, %c0_10] : memref<1x1xf32, #tpu.memory_space<smem>>
    %11 = vector.broadcast %10 : f32 to vector<1x24xf32>
    %12 = arith.addf %9, %11 : vector<1x24xf32>
    %c0_11 = arith.constant 0 : index
    %c0_12 = arith.constant 0 : index
    %13 = vector.load %arg6[%c0_11, %c0_12] : memref<1x24xf32, #tpu.memory_space<vmem>>, vector<1x24xf32>
    tpu.vector_store %arg6[%c0_11, %c0_12], %12 {strides = array<i32>} : memref<1x24xf32, #tpu.memory_space<vmem>>, vector<1x24xf32>,
    return
  }
  func.func @transform_0(%arg0: i32) -> (i32, i32) {
    %c0_i32 = arith.constant 0 : i32
    %c0_i32_0 = arith.constant 0 : i32
    return %arg0, %c0_i32 : i32, i32
  }
  func.func @transform_1(%arg0: i32) -> (i32, i32) {
    %c0_i32 = arith.constant 0 : i32
    %c0_i32_0 = arith.constant 0 : i32
    %c0_i32_1 = arith.constant 0 : i32
    return %c0_i32, %c0_i32_0 : i32, i32
  }
  func.func @transform_2(%arg0: i32) -> (i32, i32) {
    %c0_i32 = arith.constant 0 : i32
    %c0_i32_0 = arith.constant 0 : i32
    %c0_i32_1 = arith.constant 0 : i32
    return %c0_i32, %c0_i32_0 : i32, i32
  }
  func.func @transform_3(%arg0: i32) -> (i32, i32) {
    %c0_i32 = arith.constant 0 : i32
    %c0_i32_0 = arith.constant 0 : i32
    %c0_i32_1 = arith.constant 0 : i32
    return %c0_i32, %c0_i32_0 : i32, i32
  }
  func.func @transform_4(%arg0: i32) -> (i32, i32) {
    %c0_i32 = arith.constant 0 : i32
    %c0_i32_0 = arith.constant 0 : i32
    %c0_i32_1 = arith.constant 0 : i32
    return %c0_i32, %c0_i32_0 : i32, i32
  }
  func.func @transform_5(%arg0: i32) -> (i32, i32) {
    %c0_i32 = arith.constant 0 : i32
    %c0_i32_0 = arith.constant 0 : i32
    return %c0_i32, %arg0 : i32, i32
  }
}

</mosaic_0001>

<llo_original>
// kernel: tpu_custom_call.1
$region0: #{tpu_custom_call.1}
  #allocation0 [shape = 'u32[]', space=smem, size = 0x4, offset = 0x4, fixed_abs, tag = 'smem constant byte address 0x4 - core index']
  #allocation1 [shape = 'u32[144,128]{1,0:T(1,128)}', space=vmem, size = 0x12000, scoped, tag = 'internal scratch']
  #allocation2 [shape = 'f32[1,1]{1,0:T(1,128)S(6)}', space=smem, size = 0x200, scoped, tag = 'scoped memory for tpu_custom_call.1']
  %s0 = inlined_call_operand.vmem [shape: f32[20,16], index: 0, kind: input, shape index: {}]
  %s1 = inlined_call_operand.vmem [shape: f32[16,32], index: 1, kind: input, shape index: {}]
  %s2 = inlined_call_operand.vmem [shape: f32[1,32], index: 2, kind: input, shape index: {}]
  %s3 = inlined_call_operand.vmem [shape: f32[1,32], index: 3, kind: input, shape index: {}]
  %s4 = inlined_call_operand.<no memory space> [shape: f32[1,1], index: 4, kind: input, shape index: {}]
  %s5 = inlined_call_operand.hbm [shape: f32[1,24], index: 5, kind: output, shape index: {}]
  %s6 = sld [smem:[#allocation0]]
  $region30: #{tpu_custom_call.1} parent=0
    _
  %s8 = ssub.s32 1, %s6
  %s9 = scalar_select 0, %s8, %s6
  %10 = sst [smem:[#allocation2]] %s4
  $region1: #{tpu_custom_call.1} parent=0
    #allocation3 [shape = 'u8[512]{0}', space=vmem, size = 0x400, scoped, tag = 'output window, operand 0, single buffered']
    #allocation4 [shape = 's32[1]{0}', space=sflag, size = 0x4, scoped, tag = 'scoped memory for tpu_custom_call.1']
    %11 = vsyncpa [#allocation4], 0
    // Predicated region
    $region2: #{tpu_custom_call.1} parent=1 // pred_check
      _
    $region3: #{tpu_custom_call.1} parent=1 // pred_check_branch
      %13 = sbr.rel (0) target = $region5
    $region4: #{tpu_custom_call.1} parent=1 // pred_region
      _
    $region5: #{tpu_custom_call.1} parent=1 // pred_fallthru
      _
    // Predicated region
    $region6: #{tpu_custom_call.1} parent=1 // pred_check
      _
    $region7: #{tpu_custom_call.1} parent=1 // pred_check_branch
      %15 = sbr.rel (0) target = $region9
    $region8: #{tpu_custom_call.1} parent=1 // pred_region
      _
    $region9: #{tpu_custom_call.1} parent=1 // pred_fallthru
      _
    // Predicated region
    $region10: #{tpu_custom_call.1} parent=1 // pred_check
      _
    $region11: #{tpu_custom_call.1} parent=1 // pred_check_branch
      %17 = sbr.rel (0) target = $region13
    $region12: #{tpu_custom_call.1} parent=1 // pred_region
      _
    $region13: #{tpu_custom_call.1} parent=1 // pred_fallthru
      _
    // Predicated region
    $region14: #{tpu_custom_call.1} parent=1 // pred_check
      _
    $region15: #{tpu_custom_call.1} parent=1 // pred_check_branch
      %19 = sbr.rel (0) target = $region17
    $region16: #{tpu_custom_call.1} parent=1 // pred_region
      _
    $region17: #{tpu_custom_call.1} parent=1 // pred_fallthru
      _
    // Predicated region
    $region18: #{tpu_custom_call.1} parent=1 // pred_check
      _
    $region19: #{tpu_custom_call.1} parent=1 // pred_check_branch
      %21 = sbr.rel (0) target = $region21
    $region20: #{tpu_custom_call.1} parent=1 // pred_region
      _
    $region21: #{tpu_custom_call.1} parent=1 // pred_fallthru
      _
    %v22 = vld [vmem:[%s0] sm:$0xff]
    %v23 = vld [vmem:[%s0 + $0x8] sm:$0xff]
    %v24 = vld [vmem:[%s0 + $0x10] sm:$0xff]
    %v25 = vld [vmem:[%s1] sm:$0xff]
    %v26 = vld [vmem:[%s1 + $0x8] sm:$0xff]
    %v27 = vld [vmem:[%s2] sm:$0x1]
    %v29 = vlaneseq
    %v30 = vshrl.u32 %v29, 7
    %v31 = vsub.s32 0, %v30
    %v32 = vrot.slane %v27, %v31
    %vm34 = vcmask 130048
    %v36 = vsel %vm34, %v22, 0
    %v39 = vsel %vm34, %v23, 0
    %v42 = vsel %vm34, %v24, 0
    %44 = vmatprep.subr.mxu0 0.0
    %45 = vmatpush1.msra.mxu0 %v25
    %46 = vmatprep.subr.mxu0 0.0
    %47 = vmatpush1.msra.mxu0 %v26
    %48 = vmatprep.subr.mxu0 0.0
    %49 = vmatpush1.msra.mxu0 0.0
    %50 = vmatprep.subr.mxu0 0.0
    %51 = vmatpush1.msra.mxu0 0.0
    %52 = vmatprep.subr.mxu0 0.0
    %53 = vmatpush1.msra.mxu0 0.0
    %54 = vmatprep.subr.mxu0 0.0
    %55 = vmatpush1.msra.mxu0 0.0
    %56 = vmatprep.subr.mxu0 0.0
    %57 = vmatpush1.msra.mxu0 0.0
    %58 = vmatprep.subr.mxu0 0.0
    %59 = vmatpush1.msra.mxu0 0.0
    %60 = vmatprep.subr.mxu0 0.0
    %61 = vmatpush1.msra.mxu0 0.0
    %62 = vmatprep.subr.mxu0 0.0
    %63 = vmatpush1.msra.mxu0 0.0
    %64 = vmatprep.subr.mxu0 0.0
    %65 = vmatpush1.msra.mxu0 0.0
    %66 = vmatprep.subr.mxu0 0.0
    %67 = vmatpush1.msra.mxu0 0.0
    %68 = vmatprep.subr.mxu0 0.0
    %69 = vmatpush1.msra.mxu0 0.0
    %70 = vmatprep.subr.mxu0 0.0
    %71 = vmatpush1.msra.mxu0 0.0
    %72 = vmatprep.subr.mxu0 0.0
    %73 = vmatpush1.msra.mxu0 0.0
    %74 = vmatprep.subr.mxu0 0.0
    %75 = vmatpush1.msra.mxu0 0.0
    %76 = vmatprep.subr.mxu0 0.0
    %77 = vmatpush1.msra.mxu0 0.0
    %78 = vmatprep.subr.mxu0 0.0
    %79 = vmatpush1.msra.mxu0 0.0
    %80 = vmatprep.subr.mxu0 0.0
    %81 = vmatpush1.msra.mxu0 0.0
    %82 = vmatprep.subr.mxu0 0.0
    %83 = vmatpush1.msra.mxu0 0.0
    %84 = vmatprep.subr.mxu0 0.0
    %85 = vmatpush1.msra.mxu0 0.0
    %86 = vmatprep.subr.mxu0 0.0
    %87 = vmatpush1.msra.mxu0 0.0
    %88 = vmatprep.subr.mxu0 0.0
    %89 = vmatpush1.msra.mxu0 0.0
    %90 = vmatprep.subr.mxu0 0.0
    %91 = vmatpush1.msra.mxu0 0.0
    %92 = vmatprep.subr.mxu0 0.0
    %93 = vmatpush1.msra.mxu0 0.0
    %94 = vmatprep.subr.mxu0 0.0
    %95 = vmatpush1.msra.mxu0 0.0
    %96 = vmatprep.subr.mxu0 0.0
    %97 = vmatpush1.msra.mxu0 0.0
    %98 = vmatprep.subr.mxu0 0.0
    %99 = vmatpush1.msra.mxu0 0.0
    %100 = vmatprep.subr.mxu0 0.0
    %101 = vmatpush1.msra.mxu0 0.0
    %102 = vmatprep.subr.mxu0 0.0
    %103 = vmatpush1.msra.mxu0 0.0
    %104 = vmatprep.subr.mxu0 0.0
    %105 = vmatpush1.msra.mxu0 0.0
    %106 = vmatprep.subr.mxu0 0.0
    %107 = vmatpush1.msra.mxu0 0.0
    %108 = vmatprep.mubr.f32.mxu0 0.0
    %109 = vmatmul.mubr.f32.gmra.mrb[0].mxu0 %v36
    %v110 = vpop.f32.mrb[0].mxu0
    %v111 = vadd.f32 %v32, %v110
    %v112 = vpop.f32.mrb[0].mxu0
    %113 = vmatprep.mubr.f32.mxu0 0.0
    %114 = vmatmul.mubr.f32.gmra.mrb[0].mxu0 %v39
    %v115 = vpop.f32.mrb[0].mxu0
    %v116 = vadd.f32 %v32, %v115
    %v117 = vpop.f32.mrb[0].mxu0
    %118 = vmatprep.mubr.f32.mxu0 0.0
    %119 = vmatmul.mubr.f32.gmra.mrb[0].mxu0 %v42
    %v120 = vpop.f32.mrb[0].mxu0
    %v121 = vadd.f32 %v32, %v120
    %v122 = vpop.f32.mrb[0].mxu0
    %123 = vdwg.mxu0
    %v124 = vmax.f32 %v111, 0.0
    %v125 = vmax.f32 %v116, 0.0
    %v126 = vmax.f32 %v121, 0.0
    %v127 = vld [vmem:[%s3] sm:$0x1]
    %s128 = sld [smem:[#allocation2]]
    %v129 = vstv %s128
    %vm130 = vcmask 261120
    %v132 = vsel %vm130, %v127, 0
    %v135 = vsel %vm130, %v124, 0
    %v138 = vsel %vm130, %v125, 0
    %v141 = vsel %vm130, %v126, 0
    %143 = vmatprep.subr.mxu0 0.0
    %144 = vmatpush1.xpose.msra.mxu0 %v135
    %145 = vmatprep.subr.mxu0 0.0
    %146 = vmatpush1.xpose.msra.mxu0 %v138
    %147 = vmatprep.subr.mxu0 0.0
    %148 = vmatpush1.xpose.msra.mxu0 %v141
    %149 = vmatprep.subr.mxu0 0.0
    %150 = vmatpush1.xpose.msra.mxu0 0.0
    %151 = vmatprep.subr.mxu0 0.0
    %152 = vmatpush1.xpose.msra.mxu0 0.0
    %153 = vmatprep.subr.mxu0 0.0
    %154 = vmatpush1.xpose.msra.mxu0 0.0
    %155 = vmatprep.subr.mxu0 0.0
    %156 = vmatpush1.xpose.msra.mxu0 0.0
    %157 = vmatprep.subr.mxu0 0.0
    %158 = vmatpush1.xpose.msra.mxu0 0.0
    %159 = vmatprep.subr.mxu0 0.0
    %160 = vmatpush1.xpose.msra.mxu0 0.0
    %161 = vmatprep.subr.mxu0 0.0
    %162 = vmatpush1.xpose.msra.mxu0 0.0
    %163 = vmatprep.subr.mxu0 0.0
    %164 = vmatpush1.xpose.msra.mxu0 0.0
    %165 = vmatprep.subr.mxu0 0.0
    %166 = vmatpush1.xpose.msra.mxu0 0.0
    %167 = vmatprep.subr.mxu0 0.0
    %168 = vmatpush1.xpose.msra.mxu0 0.0
    %169 = vmatprep.subr.mxu0 0.0
    %170 = vmatpush1.xpose.msra.mxu0 0.0
    %171 = vmatprep.subr.mxu0 0.0
    %172 = vmatpush1.xpose.msra.mxu0 0.0
    %173 = vmatprep.subr.mxu0 0.0
    %174 = vmatpush1.xpose.msra.mxu0 0.0
    %175 = vmatprep.subr.mxu0 0.0
    %176 = vmatpush1.xpose.msra.mxu0 0.0
    %177 = vmatprep.subr.mxu0 0.0
    %178 = vmatpush1.xpose.msra.mxu0 0.0
    %179 = vmatprep.subr.mxu0 0.0
    %180 = vmatpush1.xpose.msra.mxu0 0.0
    %181 = vmatprep.subr.mxu0 0.0
    %182 = vmatpush1.xpose.msra.mxu0 0.0
    %183 = vmatprep.subr.mxu0 0.0
    %184 = vmatpush1.xpose.msra.mxu0 0.0
    %185 = vmatprep.subr.mxu0 0.0
    %186 = vmatpush1.xpose.msra.mxu0 0.0
    %187 = vmatprep.subr.mxu0 0.0
    %188 = vmatpush1.xpose.msra.mxu0 0.0
    %189 = vmatprep.subr.mxu0 0.0
    %190 = vmatpush1.xpose.msra.mxu0 0.0
    %191 = vmatprep.subr.mxu0 0.0
    %192 = vmatpush1.xpose.msra.mxu0 0.0
    %193 = vmatprep.subr.mxu0 0.0
    %194 = vmatpush1.xpose.msra.mxu0 0.0
    %195 = vmatprep.subr.mxu0 0.0
    %196 = vmatpush1.xpose.msra.mxu0 0.0
    %197 = vmatprep.subr.mxu0 0.0
    %198 = vmatpush1.xpose.msra.mxu0 0.0
    %199 = vmatprep.subr.mxu0 0.0
    %200 = vmatpush1.xpose.msra.mxu0 0.0
    %201 = vmatprep.subr.mxu0 0.0
    %202 = vmatpush1.xpose.msra.mxu0 0.0
    %203 = vmatprep.subr.mxu0 0.0
    %204 = vmatpush1.xpose.msra.mxu0 0.0
    %205 = vmatprep.subr.mxu0 0.0
    %206 = vmatpush1.xpose.msra.mxu0 0.0
    %207 = vmatprep.mubr.f32.mxu0 0.0
    %208 = vmatmul.mubr.f32.gmra.mrb[0].mxu0 %v132
    %v209 = vpop.f32.mrb[0].mxu0
    %v210 = vadd.f32 %v129, %v209
    %v211 = vpop.f32.mrb[0].mxu0
    %212 = vdwg.mxu0
    %vm213 = vcmask 188416
    %214 = vst.msk [vmem:[#allocation3] sm:$0x1] %vm213, %v210
    // Predicated region
    $region22: #{tpu_custom_call.1} parent=1 // pred_check
      _
    $region23: #{tpu_custom_call.1} parent=1 // pred_check_branch
      %216 = sbr.rel (0) target = $region25
    $region24: #{tpu_custom_call.1} parent=1 // pred_region
      %s218 = ssub.s32 16, 16
      %219 = vsyncadd [#allocation4], %s218
      %s221 = sshll.u32 [#allocation3], 4
      %s222 = int_to_ptr.vmem [resolvable:$true] %s221
      %224 = dma.vmem_to_hbm [thread:$0]  %s222, 16, %s5, [#allocation4]
    $region25: #{tpu_custom_call.1} parent=1 // pred_fallthru
      _
    // Predicated region
    $region26: #{tpu_custom_call.1} parent=1 // pred_check
      _
    $region27: #{tpu_custom_call.1} parent=1 // pred_check_branch
      %226 = sbr.rel (0) target = $region29
    $region28: #{tpu_custom_call.1} parent=1 // pred_region
      %227 = dma.done [#allocation4], 16
    $region29: #{tpu_custom_call.1} parent=1 // pred_fallthru
      _
    %228 = vsyncpa [#allocation4], 1

</llo_original>
